<compile_context>
chip_gen: v7x
topology: tpu7x:2x2x1
jax: 0.10.0
libtpu: 0.0.40
codegen_flags: <defaults>
</compile_context>

<pallas_src>
import jax
import jax.numpy as jnp
from jax.experimental import pallas as pl
from jax.experimental.pallas import tpu as pltpu


def _add_kernel(x_ref, r_ref, o_ref):
    # Pure VPU elementwise add on the current block.
    o_ref[...] = x_ref[...] + r_ref[...]


def _pick_lanes(n):
    """Widest lane count (multiple of 128) that exactly divides n, else None."""
    for lanes in (2048, 1024, 512, 256, 128):
        if n % lanes == 0:
            return lanes
    return None


def _device_tuning():
    """Per-generation (block_bytes, vmem_limit_bytes, grid_semantics)."""
    try:
        kind = jax.devices()[0].device_kind.lower()
    except Exception:  # pragma: no cover - defensive
        kind = ""
    if "v7" in kind or "7x" in kind:
        # 64 MiB physical VMEM, 2 TensorCores: 4 MiB blocks (24 MiB resident
        # with double buffering of 3 streams) under an explicit 32 MiB scoped
        # limit; shard the grid across both cores.
        return 4 << 20, 32 << 20, (pltpu.CORE_PARALLEL,)
    if "v6" in kind:
        # 128 MiB physical VMEM: 8 MiB blocks (48 MiB resident), 64 MiB limit.
        return 8 << 20, 64 << 20, ("parallel",)
    if "v5" in kind:
        # Slower HBM; 4 MiB blocks with explicit headroom over the 16 MiB
        # default scoped limit so double buffering is never silently dropped.
        return 4 << 20, 48 << 20, ("parallel",)
    # Unknown generation: settings that fit every default budget.
    return 4 << 20, 32 << 20, ("parallel",)


def _round_up(v, m):
    return ((v + m - 1) // m) * m


def _daf_2d(x2d, r2d, *, block_bytes, vmem_limit, semantics, alias):
    """Aligned path: lane-dense (rows, lanes) slab, lanes a multiple of 128."""
    rows, lanes = x2d.shape
    itemsize = jnp.dtype(x2d.dtype).itemsize
    n = rows * lanes

    max_rows = max(1, block_bytes // (lanes * itemsize))
    tile_rows = max(32, (max_rows // 32) * 32)
    if rows > 32:
        # Keep >= ~4 grid steps so both v7x TensorCores get work and the
        # software pipeline has iterations to overlap.
        tile_rows = min(tile_rows, _round_up(pl.cdiv(rows, 4), 32))
    tile_rows = min(tile_rows, rows)

    grid = (pl.cdiv(rows, tile_rows),)
    return pl.pallas_call(
        _add_kernel,
        out_shape=jax.ShapeDtypeStruct((rows, lanes), x2d.dtype),
        grid_spec=pltpu.PrefetchScalarGridSpec(
            num_scalar_prefetch=0,
            grid=grid,
            in_specs=[
                pl.BlockSpec((tile_rows, lanes), lambda i: (i, 0)),
                pl.BlockSpec((tile_rows, lanes), lambda i: (i, 0)),
            ],
            out_specs=pl.BlockSpec((tile_rows, lanes), lambda i: (i, 0)),
        ),
        compiler_params=pltpu.CompilerParams(
            dimension_semantics=semantics,
            vmem_limit_bytes=vmem_limit,
        ),
        cost_estimate=pl.CostEstimate(
            flops=n, transcendentals=0, bytes_accessed=3 * n * itemsize),
        input_output_aliases=alias,
    )(x2d, r2d)


def _daf_flat(xf, rf, *, block_bytes, vmem_limit, semantics, alias):
    """Unaligned fallback: (1, N) view, (1, TILE) blocks, edge-masked tail.

    No jnp.pad of the inputs and no output slice -> exactly 3*N*itemsize of
    HBM traffic.  A (1, TILE) block occupies (8, 128) VMEM tiles, i.e. up to
    8x its nominal bytes, so the tile is budgeted at block_bytes/8 nominal.
    """
    n = xf.shape[0]
    itemsize = jnp.dtype(xf.dtype).itemsize

    tile = max(128, ((block_bytes // (8 * itemsize)) // 128) * 128)
    # Keep >= ~4 grid steps when there is enough data.
    tile = min(tile, max(128, _round_up(pl.cdiv(n, 4), 128)))
    if tile >= n:
        tile = n  # single block equal to the full (possibly ragged) extent

    grid = (pl.cdiv(n, tile),)
    x2d = xf.reshape(1, n)
    r2d = rf.reshape(1, n)
    out = pl.pallas_call(
        _add_kernel,
        out_shape=jax.ShapeDtypeStruct((1, n), xf.dtype),
        grid_spec=pltpu.PrefetchScalarGridSpec(
            num_scalar_prefetch=0,
            grid=grid,
            in_specs=[
                pl.BlockSpec((1, tile), lambda i: (0, i)),
                pl.BlockSpec((1, tile), lambda i: (0, i)),
            ],
            out_specs=pl.BlockSpec((1, tile), lambda i: (0, i)),
        ),
        compiler_params=pltpu.CompilerParams(
            dimension_semantics=semantics,
            vmem_limit_bytes=vmem_limit,
        ),
        cost_estimate=pl.CostEstimate(
            flops=n, transcendentals=0, bytes_accessed=3 * n * itemsize),
        input_output_aliases=alias,
    )(x2d, r2d)
    return out.reshape(n)


def daf_forward(x, residual, *, min_pallas_bytes=512 * 1024, donate_x=False):
    """DirectAddFuse: returns x + residual, computed in a Pallas TPU kernel."""
    assert x.shape == residual.shape, "x and residual must have the same shape"
    assert x.dtype == residual.dtype, "x and residual must have the same dtype"
    orig_shape = x.shape
    n = x.size
    itemsize = jnp.dtype(x.dtype).itemsize

    # Small-size bypass: nothing to pipeline, pallas_call launch + wrapper
    # reshapes dominate; XLA's fused add is already at roofline.
    if n == 0 or n * itemsize < min_pallas_bytes:
        return x + residual

    block_bytes, vmem_limit, semantics = _device_tuning()
    alias = {0: 0} if donate_x else {}

    xf = x.reshape(-1)
    rf = residual.reshape(-1)
    lanes = _pick_lanes(n)

    def run(sem):
        if lanes is not None:
            out2d = _daf_2d(
                xf.reshape(n // lanes, lanes), rf.reshape(n // lanes, lanes),
                block_bytes=block_bytes, vmem_limit=vmem_limit,
                semantics=sem, alias=alias)
            return out2d.reshape(orig_shape)
        out1d = _daf_flat(
            xf, rf, block_bytes=block_bytes, vmem_limit=vmem_limit,
            semantics=sem, alias=alias)
        return out1d.reshape(orig_shape)

    try:
        return run(semantics)
    except Exception:
        if semantics == ("parallel",):
            raise
        # CORE_PARALLEL not accepted on this chip/runtime; plain "parallel"
        # always lowers.
        return run(("parallel",))


if __name__ == "__main__":
    key = jax.random.PRNGKey(0)
    kx, kr = jax.random.split(key)

    # NCHW demo shape (batch=2, channels=4, spatial=16x16).  Force the Pallas
    # path (min_pallas_bytes=0) so the kernel itself is exercised at this size.
    x = jax.random.normal(kx, (2, 4, 16, 16), dtype=jnp.float32)
    residual = jax.random.normal(kr, (2, 4, 16, 16), dtype=jnp.float32)
    out = daf_forward(x, residual, min_pallas_bytes=0)
    jax.block_until_ready(out)
    ref = x + residual
    assert out.shape == ref.shape
    assert jnp.allclose(out, ref, atol=1e-6, rtol=1e-6)

    # Larger conv-map-like shape: above the bypass threshold, aligned 2-D path.
    x2 = jax.random.normal(kx, (2, 64, 56, 56), dtype=jnp.float32)
    r2 = jax.random.normal(kr, (2, 64, 56, 56), dtype=jnp.float32)
    out2 = daf_forward(x2, r2)
    jax.block_until_ready(out2)
    assert jnp.allclose(out2, x2 + r2, atol=1e-6, rtol=1e-6)

    # Odd element count (n % 128 != 0): exercises the pad-free (1, N) fallback
    # with an edge-masked ragged tail.
    x3 = jax.random.normal(kx, (3, 5, 7, 11), dtype=jnp.float32)
    r3 = jax.random.normal(kr, (3, 5, 7, 11), dtype=jnp.float32)
    out3 = daf_forward(x3, r3, min_pallas_bytes=0)
    jax.block_until_ready(out3)
    assert jnp.allclose(out3, x3 + r3, atol=1e-6, rtol=1e-6)

    print("KERNEL_OK")
</pallas_src>

<mosaic_0001>
module attributes {stable_mosaic.version = 11 : i64} {
  func.func @_add_kernel(%arg0: i32, %arg1: memref<1x2048xf32, #tpu.memory_space<vmem>>, %arg2: memref<1x2048xf32, #tpu.memory_space<vmem>>, %arg3: memref<1x2048xf32, #tpu.memory_space<vmem>>) attributes {dimension_semantics = [#tpu.dimension_semantics<parallel>], iteration_bounds = array<i64: 1>, scalar_prefetch = 0 : i64, scratch_operands = 0 : i64, tpu.core_type = #tpu.core_type<tc>, window_params = [{transform_indices = @transform_0, window_bounds = array<i64: 1, 2048>}, {transform_indices = @transform_1, window_bounds = array<i64: 1, 2048>}, {transform_indices = @transform_2, window_bounds = array<i64: 1, 2048>}]} {
    %c0 = arith.constant 0 : index
    %c0_0 = arith.constant 0 : index
    %0 = vector.load %arg1[%c0, %c0_0] : memref<1x2048xf32, #tpu.memory_space<vmem>>, vector<1x2048xf32>
    %c0_1 = arith.constant 0 : index
    %c0_2 = arith.constant 0 : index
    %1 = vector.load %arg2[%c0_1, %c0_2] : memref<1x2048xf32, #tpu.memory_space<vmem>>, vector<1x2048xf32>
    %2 = arith.addf %0, %1 : vector<1x2048xf32>
    %c0_3 = arith.constant 0 : index
    %c0_4 = arith.constant 0 : index
    %3 = vector.load %arg3[%c0_3, %c0_4] : memref<1x2048xf32, #tpu.memory_space<vmem>>, vector<1x2048xf32>
    tpu.vector_store %arg3[%c0_3, %c0_4], %2 {strides = array<i32>} : memref<1x2048xf32, #tpu.memory_space<vmem>>, vector<1x2048xf32>,
    return
  }
  func.func @transform_0(%arg0: i32) -> (i32, i32) {
    %c0_i32 = arith.constant 0 : i32
    %c0_i32_0 = arith.constant 0 : i32
    return %arg0, %c0_i32 : i32, i32
  }
  func.func @transform_1(%arg0: i32) -> (i32, i32) {
    %c0_i32 = arith.constant 0 : i32
    %c0_i32_0 = arith.constant 0 : i32
    return %arg0, %c0_i32 : i32, i32
  }
  func.func @transform_2(%arg0: i32) -> (i32, i32) {
    %c0_i32 = arith.constant 0 : i32
    %c0_i32_0 = arith.constant 0 : i32
    return %arg0, %c0_i32 : i32, i32
  }
}

</mosaic_0001>

<llo_original>
// kernel: tpu_custom_call.1
$region0: #{tpu_custom_call.1}
  #allocation0 [shape = 'u32[]', space=smem, size = 0x4, offset = 0x4, fixed_abs, tag = 'smem constant byte address 0x4 - core index']
  #allocation1 [shape = 'u32[144,128]{1,0:T(1,128)}', space=vmem, size = 0x12000, scoped, tag = 'internal scratch']
  %s0 = inlined_call_operand.hbm [shape: f32[1,2048], index: 0, kind: input, shape index: {}]
  %s1 = inlined_call_operand.hbm [shape: f32[1,2048], index: 1, kind: input, shape index: {}]
  %s2 = inlined_call_operand.hbm [shape: f32[1,2048], index: 2, kind: output, shape index: {}]
  %s3 = sld [smem:[#allocation0]]
  $region26: #{tpu_custom_call.1} parent=0
    _
  %s5 = ssub.s32 1, %s3
  %s6 = scalar_select 0, %s5, %s3
  $region1: #{tpu_custom_call.1} parent=0
    #allocation2 [shape = 'u8[8192]{0}', space=vmem, size = 0x2000, scoped, tag = 'input window, operand 0, single buffered']
    #allocation3 [shape = 's32[1]{0}', space=sflag, size = 0x4, scoped, tag = 'scoped memory for tpu_custom_call.1']
    #allocation4 [shape = 's32[1]{0}', space=sflag, size = 0x4, scoped, tag = 'scoped memory for tpu_custom_call.1']
    #allocation5 [shape = 'u8[8192]{0}', space=vmem, size = 0x2000, scoped, tag = 'input window, operand 1, single buffered']
    #allocation6 [shape = 's32[1]{0}', space=sflag, size = 0x4, scoped, tag = 'scoped memory for tpu_custom_call.1']
    #allocation7 [shape = 'u8[8192]{0}', space=vmem, size = 0x2000, scoped, tag = 'output window, operand 0, single buffered']
    %7 = vsyncpa [#allocation3], 0
    %8 = vsyncpa [#allocation6], 0
    %9 = vsyncpa [#allocation4], 0
    // Predicated region
    $region2: #{tpu_custom_call.1} parent=1 // pred_check
      _
    $region3: #{tpu_custom_call.1} parent=1 // pred_check_branch
      %11 = sbr.rel (0) target = $region5
    $region4: #{tpu_custom_call.1} parent=1 // pred_region
      %s13 = ssub.s32 256, 256
      %14 = vsyncadd [#allocation3], %s13
      %s16 = sshll.u32 [#allocation2], 4
      %s17 = int_to_ptr.vmem [resolvable:$true] %s16
      %19 = dma.hbm_to_vmem [thread:$0]  %s0, 256, %s17, [#allocation3]
    $region5: #{tpu_custom_call.1} parent=1 // pred_fallthru
      _
    // Predicated region
    $region6: #{tpu_custom_call.1} parent=1 // pred_check
      _
    $region7: #{tpu_custom_call.1} parent=1 // pred_check_branch
      %21 = sbr.rel (0) target = $region9
    $region8: #{tpu_custom_call.1} parent=1 // pred_region
      %s23 = ssub.s32 256, 256
      %24 = vsyncadd [#allocation6], %s23
      %s26 = sshll.u32 [#allocation5], 4
      %s27 = int_to_ptr.vmem [resolvable:$true] %s26
      %29 = dma.hbm_to_vmem [thread:$0]  %s1, 256, %s27, [#allocation6]
    $region9: #{tpu_custom_call.1} parent=1 // pred_fallthru
      _
    // Predicated region
    $region10: #{tpu_custom_call.1} parent=1 // pred_check
      _
    $region11: #{tpu_custom_call.1} parent=1 // pred_check_branch
      %31 = sbr.rel (0) target = $region13
    $region12: #{tpu_custom_call.1} parent=1 // pred_region
      %32 = dma.done [#allocation3], 256
    $region13: #{tpu_custom_call.1} parent=1 // pred_fallthru
      _
    // Predicated region
    $region14: #{tpu_custom_call.1} parent=1 // pred_check
      _
    $region15: #{tpu_custom_call.1} parent=1 // pred_check_branch
      %34 = sbr.rel (0) target = $region17
    $region16: #{tpu_custom_call.1} parent=1 // pred_region
      %35 = dma.done [#allocation6], 256
    $region17: #{tpu_custom_call.1} parent=1 // pred_fallthru
      _
    %v36 = vld [vmem:[#allocation2] sm:$0xff]
    %v37 = vld [vmem:[#allocation2 + $0x8] sm:$0xff]
    %v38 = vld [vmem:[#allocation5] sm:$0xff]
    %v39 = vld [vmem:[#allocation5 + $0x8] sm:$0xff]
    %v40 = vadd.f32 %v36, %v38
    %v41 = vadd.f32 %v37, %v39
    %42 = vst [vmem:[#allocation7] sm:$0xff] %v40
    %43 = vst [vmem:[#allocation7 + $0x8] sm:$0xff] %v41
    // Predicated region
    $region18: #{tpu_custom_call.1} parent=1 // pred_check
      _
    $region19: #{tpu_custom_call.1} parent=1 // pred_check_branch
      %45 = sbr.rel (0) target = $region21
    $region20: #{tpu_custom_call.1} parent=1 // pred_region
      %s47 = ssub.s32 256, 256
      %48 = vsyncadd [#allocation4], %s47
      %s50 = sshll.u32 [#allocation7], 4
      %s51 = int_to_ptr.vmem [resolvable:$true] %s50
      %53 = dma.vmem_to_hbm [thread:$0]  %s51, 256, %s2, [#allocation4]
    $region21: #{tpu_custom_call.1} parent=1 // pred_fallthru
      _
    // Predicated region
    $region22: #{tpu_custom_call.1} parent=1 // pred_check
      _
    $region23: #{tpu_custom_call.1} parent=1 // pred_check_branch
      %55 = sbr.rel (0) target = $region25
    $region24: #{tpu_custom_call.1} parent=1 // pred_region
      %56 = dma.done [#allocation4], 256
    $region25: #{tpu_custom_call.1} parent=1 // pred_fallthru
      _
    %57 = vsyncpa [#allocation3], 1
    %58 = vsyncpa [#allocation6], 1
    %59 = vsyncpa [#allocation4], 1

</llo_original>
